<compile_context>
chip_gen: v5e
topology: v5e:2x2
jax: 0.10.0
libtpu: 0.0.40
codegen_flags: <defaults>
</compile_context>

<pallas_src>
import jax
import jax.numpy as jnp
from jax.experimental import pallas as pl
from jax.experimental.pallas import tpu as pltpu

IN_FEATURES = 4
HIDDEN = 8
OUT_FEATURES = 3

LANE = 128            # vreg lane width
SUBLANE = 8           # f32 sublanes per vreg
MAX_BLOCK_ROWS = 512  # sublane-rows per grid step (512*128 = 64K batch lanes)


def _round_up(x, m):
    return ((x + m - 1) // m) * m


def mlp_softmax_kernel(x_ref, w1_ref, b1_ref, w2_ref, b2_ref, o_ref):
    # x_ref : (IN_FEATURES,  SB, 128) VMEM f32, batch on (sublane, lane).
    # w1_ref: (HIDDEN*IN_FEATURES,)  SMEM f32    b1_ref: (HIDDEN,)       SMEM f32
    # w2_ref: (OUT_FEATURES*HIDDEN,) SMEM f32    b2_ref: (OUT_FEATURES,) SMEM f32
    # o_ref : (OUT_FEATURES, SB, 128) VMEM f32, lane-dense output.

    # Load each feature plane once; each is a full (SB, 128) tile.
    x_rows = [x_ref[k] for k in range(IN_FEATURES)]

    # fc1 + ReLU: h[o] = relu(sum_k W1[o,k] * x[k] + b1[o])  (scalar*tile FMAs)
    h_rows = []
    for o in range(HIDDEN):
        acc = x_rows[0] * w1_ref[o * IN_FEATURES] + b1_ref[o]
        for k in range(1, IN_FEATURES):
            acc = acc + x_rows[k] * w1_ref[o * IN_FEATURES + k]
        h_rows.append(jnp.maximum(acc, 0.0))

    # fc2: logits[o] = sum_k W2[o,k] * h[k] + b2[o]
    logit_rows = []
    for o in range(OUT_FEATURES):
        acc = h_rows[0] * w2_ref[o * HIDDEN] + b2_ref[o]
        for k in range(1, HIDDEN):
            acc = acc + h_rows[k] * w2_ref[o * HIDDEN + k]
        logit_rows.append(acc)

    # Numerically-stable softmax across the OUT_FEATURES planes (unrolled).
    m = logit_rows[0]
    for o in range(1, OUT_FEATURES):
        m = jnp.maximum(m, logit_rows[o])
    e_rows = [jnp.exp(r - m) for r in logit_rows]
    denom = e_rows[0]
    for o in range(1, OUT_FEATURES):
        denom = denom + e_rows[o]
    inv = 1.0 / denom  # exact divide: exact row sums, negligible extra cost

    # Direct per-plane stores (no concatenate / relayout).
    for o in range(OUT_FEATURES):
        o_ref[o] = e_rows[o] * inv


def mlp_forward_lanes(x3, w1, b1, w2, b2, *, block_rows):
    """Lane-dense entry point.

    x3: (IN_FEATURES, R, 128) f32 with batch packed on (sublane, lane);
    returns (OUT_FEATURES, R, 128) f32.  R must be a multiple of block_rows
    and block_rows a multiple of 8.
    """
    _, R, _ = x3.shape
    num_blocks = R // block_rows

    # Flat 1-D weights/biases -> compact SMEM (no 2-D SMEM padding), scalar reads.
    w1f = w1.reshape(-1).astype(jnp.float32)   # (32,)
    b1f = b1.reshape(-1).astype(jnp.float32)   # (8,)
    w2f = w2.reshape(-1).astype(jnp.float32)   # (24,)
    b2f = b2.reshape(-1).astype(jnp.float32)   # (3,)

    def smem_spec(n):
        return pl.BlockSpec((n,), lambda i: (0,),
                            memory_space=pltpu.MemorySpace.SMEM)

    return pl.pallas_call(
        mlp_softmax_kernel,
        out_shape=jax.ShapeDtypeStruct((OUT_FEATURES, R, LANE), jnp.float32),
        grid_spec=pltpu.PrefetchScalarGridSpec(
            num_scalar_prefetch=0,
            grid=(num_blocks,),
            in_specs=[
                pl.BlockSpec((IN_FEATURES, block_rows, LANE),
                             lambda i: (0, i, 0)),
                smem_spec(HIDDEN * IN_FEATURES),   # w1
                smem_spec(HIDDEN),                 # b1
                smem_spec(OUT_FEATURES * HIDDEN),  # w2
                smem_spec(OUT_FEATURES),           # b2
            ],
            out_specs=pl.BlockSpec((OUT_FEATURES, block_rows, LANE),
                                   lambda i: (0, i, 0)),
        ),
        compiler_params=pltpu.CompilerParams(
            dimension_semantics=("parallel",)),
    )(x3, w1f, b1f, w2f, b2f)


def mlp_forward(x, w1, b1, w2, b2, *, max_block_rows=MAX_BLOCK_ROWS):
    """PyTorch-facing wrapper.

    x: (B, 4) f32; w1: (8, 4); b1: (8,); w2: (3, 8); b2: (3,)  (PyTorch layout).
    Returns (B, 3) softmax probabilities.
    """
    B = x.shape[0]

    # Batch -> (sublane, lane) packing.  Clamp the block to the batch so small
    # batches are not padded up to a huge block; for large batches this gives
    # 64K-lane steps and >=4 grid blocks (v7x 2-TC sharding).
    rows_needed = pl.cdiv(B, LANE)
    block_rows = min(max_block_rows, _round_up(max(rows_needed, 1), SUBLANE))
    num_blocks = pl.cdiv(rows_needed, block_rows)
    R = num_blocks * block_rows
    Bp = R * LANE

    xT = jnp.transpose(x.astype(jnp.float32))        # (4, B)  (layout plumbing)
    if Bp != B:
        xT = jnp.pad(xT, ((0, 0), (0, Bp - B)))      # pad only when needed
    x3 = xT.reshape(IN_FEATURES, R, LANE)

    o3 = mlp_forward_lanes(x3, w1, b1, w2, b2, block_rows=block_rows)

    out = o3.reshape(OUT_FEATURES, Bp)
    if Bp != B:
        out = out[:, :B]                              # drop padded columns
    return jnp.transpose(out)                         # (B, 3)


def init_params(key):
    """Deterministic init mimicking nn.Linear's uniform(-1/sqrt(fan_in), ...)."""
    k1, k2, k3, k4 = jax.random.split(key, 4)
    bound1 = 1.0 / jnp.sqrt(4.0)
    w1 = jax.random.uniform(k1, (HIDDEN, IN_FEATURES), jnp.float32, -bound1, bound1)
    b1 = jax.random.uniform(k2, (HIDDEN,), jnp.float32, -bound1, bound1)
    bound2 = 1.0 / jnp.sqrt(8.0)
    w2 = jax.random.uniform(k3, (OUT_FEATURES, HIDDEN), jnp.float32, -bound2, bound2)
    b2 = jax.random.uniform(k4, (OUT_FEATURES,), jnp.float32, -bound2, bound2)
    return w1, b1, w2, b2


if __name__ == "__main__":
    key = jax.random.PRNGKey(0)
    kx, kp = jax.random.split(key)

    # Small batch; max_block_rows=8 forces a 2-block grid and exercises the
    # padding path (2000 -> 2048 lanes) without large shapes.
    B = 2000
    x = jax.random.normal(kx, (B, IN_FEATURES), jnp.float32)
    w1, b1, w2, b2 = init_params(kp)

    out = mlp_forward(x, w1, b1, w2, b2, max_block_rows=8)
    out = jax.block_until_ready(out)

    # Reference in plain JAX (PyTorch semantics: x @ W^T + b, last-dim softmax).
    h_ref = jnp.maximum(x @ w1.T + b1, 0.0)
    ref = jax.nn.softmax(h_ref @ w2.T + b2, axis=-1)

    assert out.shape == (B, OUT_FEATURES)
    assert jnp.allclose(out, ref, atol=1e-4, rtol=1e-4), \
        float(jnp.max(jnp.abs(out - ref)))
    assert jnp.allclose(jnp.sum(out, axis=-1), 1.0, atol=1e-4)

    print("KERNEL_OK")
</pallas_src>

<mosaic_0001>
module attributes {stable_mosaic.version = 11 : i64} {
  func.func @mlp_softmax_kernel(%arg0: i32, %arg1: memref<4x8x128xf32, #tpu.memory_space<vmem>>, %arg2: memref<32xf32, #tpu.memory_space<smem>>, %arg3: memref<8xf32, #tpu.memory_space<smem>>, %arg4: memref<24xf32, #tpu.memory_space<smem>>, %arg5: memref<3xf32, #tpu.memory_space<smem>>, %arg6: memref<3x8x128xf32, #tpu.memory_space<vmem>>) attributes {dimension_semantics = [#tpu.dimension_semantics<parallel>], iteration_bounds = array<i64: 2>, scalar_prefetch = 0 : i64, scratch_operands = 0 : i64, tpu.core_type = #tpu.core_type<tc>, window_params = [{transform_indices = @transform_0, window_bounds = array<i64: 4, 8, 128>}, {transform_indices = @transform_1, window_bounds = array<i64: 32>}, {transform_indices = @transform_2, window_bounds = array<i64: 8>}, {transform_indices = @transform_3, window_bounds = array<i64: 24>}, {transform_indices = @transform_4, window_bounds = array<i64: 3>}, {transform_indices = @transform_5, window_bounds = array<i64: 3, 8, 128>}]} {
    %c0 = arith.constant 0 : index
    %c0_0 = arith.constant 0 : index
    %c0_1 = arith.constant 0 : index
    %0 = vector.load %arg1[%c0, %c0_0, %c0_1] : memref<4x8x128xf32, #tpu.memory_space<vmem>>, vector<1x8x128xf32>
    %1 = vector.shape_cast %0 : vector<1x8x128xf32> to vector<8x128xf32>
    %c1 = arith.constant 1 : index
    %c0_2 = arith.constant 0 : index
    %c0_3 = arith.constant 0 : index
    %2 = vector.load %arg1[%c1, %c0_2, %c0_3] : memref<4x8x128xf32, #tpu.memory_space<vmem>>, vector<1x8x128xf32>
    %3 = vector.shape_cast %2 : vector<1x8x128xf32> to vector<8x128xf32>
    %c2 = arith.constant 2 : index
    %c0_4 = arith.constant 0 : index
    %c0_5 = arith.constant 0 : index
    %4 = vector.load %arg1[%c2, %c0_4, %c0_5] : memref<4x8x128xf32, #tpu.memory_space<vmem>>, vector<1x8x128xf32>
    %5 = vector.shape_cast %4 : vector<1x8x128xf32> to vector<8x128xf32>
    %c3 = arith.constant 3 : index
    %c0_6 = arith.constant 0 : index
    %c0_7 = arith.constant 0 : index
    %6 = vector.load %arg1[%c3, %c0_6, %c0_7] : memref<4x8x128xf32, #tpu.memory_space<vmem>>, vector<1x8x128xf32>
    %7 = vector.shape_cast %6 : vector<1x8x128xf32> to vector<8x128xf32>
    %c0_8 = arith.constant 0 : index
    %8 = memref.load %arg2[%c0_8] : memref<32xf32, #tpu.memory_space<smem>>
    %9 = vector.broadcast %8 : f32 to vector<8x128xf32>
    %10 = arith.mulf %1, %9 : vector<8x128xf32>
    %c0_9 = arith.constant 0 : index
    %11 = memref.load %arg3[%c0_9] : memref<8xf32, #tpu.memory_space<smem>>
    %12 = vector.broadcast %11 : f32 to vector<8x128xf32>
    %13 = arith.addf %10, %12 : vector<8x128xf32>
    %c1_10 = arith.constant 1 : index
    %14 = memref.load %arg2[%c1_10] : memref<32xf32, #tpu.memory_space<smem>>
    %15 = vector.broadcast %14 : f32 to vector<8x128xf32>
    %16 = arith.mulf %3, %15 : vector<8x128xf32>
    %17 = arith.addf %13, %16 : vector<8x128xf32>
    %c2_11 = arith.constant 2 : index
    %18 = memref.load %arg2[%c2_11] : memref<32xf32, #tpu.memory_space<smem>>
    %19 = vector.broadcast %18 : f32 to vector<8x128xf32>
    %20 = arith.mulf %5, %19 : vector<8x128xf32>
    %21 = arith.addf %17, %20 : vector<8x128xf32>
    %c3_12 = arith.constant 3 : index
    %22 = memref.load %arg2[%c3_12] : memref<32xf32, #tpu.memory_space<smem>>
    %23 = vector.broadcast %22 : f32 to vector<8x128xf32>
    %24 = arith.mulf %7, %23 : vector<8x128xf32>
    %25 = arith.addf %21, %24 : vector<8x128xf32>
    %cst = arith.constant 0.000000e+00 : f32
    %26 = vector.broadcast %cst : f32 to vector<8x128xf32>
    %27 = arith.maximumf %25, %26 : vector<8x128xf32>
    %c4 = arith.constant 4 : index
    %28 = memref.load %arg2[%c4] : memref<32xf32, #tpu.memory_space<smem>>
    %29 = vector.broadcast %28 : f32 to vector<8x128xf32>
    %30 = arith.mulf %1, %29 : vector<8x128xf32>
    %c1_13 = arith.constant 1 : index
    %31 = memref.load %arg3[%c1_13] : memref<8xf32, #tpu.memory_space<smem>>
    %32 = vector.broadcast %31 : f32 to vector<8x128xf32>
    %33 = arith.addf %30, %32 : vector<8x128xf32>
    %c5 = arith.constant 5 : index
    %34 = memref.load %arg2[%c5] : memref<32xf32, #tpu.memory_space<smem>>
    %35 = vector.broadcast %34 : f32 to vector<8x128xf32>
    %36 = arith.mulf %3, %35 : vector<8x128xf32>
    %37 = arith.addf %33, %36 : vector<8x128xf32>
    %c6 = arith.constant 6 : index
    %38 = memref.load %arg2[%c6] : memref<32xf32, #tpu.memory_space<smem>>
    %39 = vector.broadcast %38 : f32 to vector<8x128xf32>
    %40 = arith.mulf %5, %39 : vector<8x128xf32>
    %41 = arith.addf %37, %40 : vector<8x128xf32>
    %c7 = arith.constant 7 : index
    %42 = memref.load %arg2[%c7] : memref<32xf32, #tpu.memory_space<smem>>
    %43 = vector.broadcast %42 : f32 to vector<8x128xf32>
    %44 = arith.mulf %7, %43 : vector<8x128xf32>
    %45 = arith.addf %41, %44 : vector<8x128xf32>
    %cst_14 = arith.constant 0.000000e+00 : f32
    %46 = vector.broadcast %cst_14 : f32 to vector<8x128xf32>
    %47 = arith.maximumf %45, %46 : vector<8x128xf32>
    %c8 = arith.constant 8 : index
    %48 = memref.load %arg2[%c8] : memref<32xf32, #tpu.memory_space<smem>>
    %49 = vector.broadcast %48 : f32 to vector<8x128xf32>
    %50 = arith.mulf %1, %49 : vector<8x128xf32>
    %c2_15 = arith.constant 2 : index
    %51 = memref.load %arg3[%c2_15] : memref<8xf32, #tpu.memory_space<smem>>
    %52 = vector.broadcast %51 : f32 to vector<8x128xf32>
    %53 = arith.addf %50, %52 : vector<8x128xf32>
    %c9 = arith.constant 9 : index
    %54 = memref.load %arg2[%c9] : memref<32xf32, #tpu.memory_space<smem>>
    %55 = vector.broadcast %54 : f32 to vector<8x128xf32>
    %56 = arith.mulf %3, %55 : vector<8x128xf32>
    %57 = arith.addf %53, %56 : vector<8x128xf32>
    %c10 = arith.constant 10 : index
    %58 = memref.load %arg2[%c10] : memref<32xf32, #tpu.memory_space<smem>>
    %59 = vector.broadcast %58 : f32 to vector<8x128xf32>
    %60 = arith.mulf %5, %59 : vector<8x128xf32>
    %61 = arith.addf %57, %60 : vector<8x128xf32>
    %c11 = arith.constant 11 : index
    %62 = memref.load %arg2[%c11] : memref<32xf32, #tpu.memory_space<smem>>
    %63 = vector.broadcast %62 : f32 to vector<8x128xf32>
    %64 = arith.mulf %7, %63 : vector<8x128xf32>
    %65 = arith.addf %61, %64 : vector<8x128xf32>
    %cst_16 = arith.constant 0.000000e+00 : f32
    %66 = vector.broadcast %cst_16 : f32 to vector<8x128xf32>
    %67 = arith.maximumf %65, %66 : vector<8x128xf32>
    %c12 = arith.constant 12 : index
    %68 = memref.load %arg2[%c12] : memref<32xf32, #tpu.memory_space<smem>>
    %69 = vector.broadcast %68 : f32 to vector<8x128xf32>
    %70 = arith.mulf %1, %69 : vector<8x128xf32>
    %c3_17 = arith.constant 3 : index
    %71 = memref.load %arg3[%c3_17] : memref<8xf32, #tpu.memory_space<smem>>
    %72 = vector.broadcast %71 : f32 to vector<8x128xf32>
    %73 = arith.addf %70, %72 : vector<8x128xf32>
    %c13 = arith.constant 13 : index
    %74 = memref.load %arg2[%c13] : memref<32xf32, #tpu.memory_space<smem>>
    %75 = vector.broadcast %74 : f32 to vector<8x128xf32>
    %76 = arith.mulf %3, %75 : vector<8x128xf32>
    %77 = arith.addf %73, %76 : vector<8x128xf32>
    %c14 = arith.constant 14 : index
    %78 = memref.load %arg2[%c14] : memref<32xf32, #tpu.memory_space<smem>>
    %79 = vector.broadcast %78 : f32 to vector<8x128xf32>
    %80 = arith.mulf %5, %79 : vector<8x128xf32>
    %81 = arith.addf %77, %80 : vector<8x128xf32>
    %c15 = arith.constant 15 : index
    %82 = memref.load %arg2[%c15] : memref<32xf32, #tpu.memory_space<smem>>
    %83 = vector.broadcast %82 : f32 to vector<8x128xf32>
    %84 = arith.mulf %7, %83 : vector<8x128xf32>
    %85 = arith.addf %81, %84 : vector<8x128xf32>
    %cst_18 = arith.constant 0.000000e+00 : f32
    %86 = vector.broadcast %cst_18 : f32 to vector<8x128xf32>
    %87 = arith.maximumf %85, %86 : vector<8x128xf32>
    %c16 = arith.constant 16 : index
    %88 = memref.load %arg2[%c16] : memref<32xf32, #tpu.memory_space<smem>>
    %89 = vector.broadcast %88 : f32 to vector<8x128xf32>
    %90 = arith.mulf %1, %89 : vector<8x128xf32>
    %c4_19 = arith.constant 4 : index
    %91 = memref.load %arg3[%c4_19] : memref<8xf32, #tpu.memory_space<smem>>
    %92 = vector.broadcast %91 : f32 to vector<8x128xf32>
    %93 = arith.addf %90, %92 : vector<8x128xf32>
    %c17 = arith.constant 17 : index
    %94 = memref.load %arg2[%c17] : memref<32xf32, #tpu.memory_space<smem>>
    %95 = vector.broadcast %94 : f32 to vector<8x128xf32>
    %96 = arith.mulf %3, %95 : vector<8x128xf32>
    %97 = arith.addf %93, %96 : vector<8x128xf32>
    %c18 = arith.constant 18 : index
    %98 = memref.load %arg2[%c18] : memref<32xf32, #tpu.memory_space<smem>>
    %99 = vector.broadcast %98 : f32 to vector<8x128xf32>
    %100 = arith.mulf %5, %99 : vector<8x128xf32>
    %101 = arith.addf %97, %100 : vector<8x128xf32>
    %c19 = arith.constant 19 : index
    %102 = memref.load %arg2[%c19] : memref<32xf32, #tpu.memory_space<smem>>
    %103 = vector.broadcast %102 : f32 to vector<8x128xf32>
    %104 = arith.mulf %7, %103 : vector<8x128xf32>
    %105 = arith.addf %101, %104 : vector<8x128xf32>
    %cst_20 = arith.constant 0.000000e+00 : f32
    %106 = vector.broadcast %cst_20 : f32 to vector<8x128xf32>
    %107 = arith.maximumf %105, %106 : vector<8x128xf32>
    %c20 = arith.constant 20 : index
    %108 = memref.load %arg2[%c20] : memref<32xf32, #tpu.memory_space<smem>>
    %109 = vector.broadcast %108 : f32 to vector<8x128xf32>
    %110 = arith.mulf %1, %109 : vector<8x128xf32>
    %c5_21 = arith.constant 5 : index
    %111 = memref.load %arg3[%c5_21] : memref<8xf32, #tpu.memory_space<smem>>
    %112 = vector.broadcast %111 : f32 to vector<8x128xf32>
    %113 = arith.addf %110, %112 : vector<8x128xf32>
    %c21 = arith.constant 21 : index
    %114 = memref.load %arg2[%c21] : memref<32xf32, #tpu.memory_space<smem>>
    %115 = vector.broadcast %114 : f32 to vector<8x128xf32>
    %116 = arith.mulf %3, %115 : vector<8x128xf32>
    %117 = arith.addf %113, %116 : vector<8x128xf32>
    %c22 = arith.constant 22 : index
    %118 = memref.load %arg2[%c22] : memref<32xf32, #tpu.memory_space<smem>>
    %119 = vector.broadcast %118 : f32 to vector<8x128xf32>
    %120 = arith.mulf %5, %119 : vector<8x128xf32>
    %121 = arith.addf %117, %120 : vector<8x128xf32>
    %c23 = arith.constant 23 : index
    %122 = memref.load %arg2[%c23] : memref<32xf32, #tpu.memory_space<smem>>
    %123 = vector.broadcast %122 : f32 to vector<8x128xf32>
    %124 = arith.mulf %7, %123 : vector<8x128xf32>
    %125 = arith.addf %121, %124 : vector<8x128xf32>
    %cst_22 = arith.constant 0.000000e+00 : f32
    %126 = vector.broadcast %cst_22 : f32 to vector<8x128xf32>
    %127 = arith.maximumf %125, %126 : vector<8x128xf32>
    %c24 = arith.constant 24 : index
    %128 = memref.load %arg2[%c24] : memref<32xf32, #tpu.memory_space<smem>>
    %129 = vector.broadcast %128 : f32 to vector<8x128xf32>
    %130 = arith.mulf %1, %129 : vector<8x128xf32>
    %c6_23 = arith.constant 6 : index
    %131 = memref.load %arg3[%c6_23] : memref<8xf32, #tpu.memory_space<smem>>
    %132 = vector.broadcast %131 : f32 to vector<8x128xf32>
    %133 = arith.addf %130, %132 : vector<8x128xf32>
    %c25 = arith.constant 25 : index
    %134 = memref.load %arg2[%c25] : memref<32xf32, #tpu.memory_space<smem>>
    %135 = vector.broadcast %134 : f32 to vector<8x128xf32>
    %136 = arith.mulf %3, %135 : vector<8x128xf32>
    %137 = arith.addf %133, %136 : vector<8x128xf32>
    %c26 = arith.constant 26 : index
    %138 = memref.load %arg2[%c26] : memref<32xf32, #tpu.memory_space<smem>>
    %139 = vector.broadcast %138 : f32 to vector<8x128xf32>
    %140 = arith.mulf %5, %139 : vector<8x128xf32>
    %141 = arith.addf %137, %140 : vector<8x128xf32>
    %c27 = arith.constant 27 : index
    %142 = memref.load %arg2[%c27] : memref<32xf32, #tpu.memory_space<smem>>
    %143 = vector.broadcast %142 : f32 to vector<8x128xf32>
    %144 = arith.mulf %7, %143 : vector<8x128xf32>
    %145 = arith.addf %141, %144 : vector<8x128xf32>
    %cst_24 = arith.constant 0.000000e+00 : f32
    %146 = vector.broadcast %cst_24 : f32 to vector<8x128xf32>
    %147 = arith.maximumf %145, %146 : vector<8x128xf32>
    %c28 = arith.constant 28 : index
    %148 = memref.load %arg2[%c28] : memref<32xf32, #tpu.memory_space<smem>>
    %149 = vector.broadcast %148 : f32 to vector<8x128xf32>
    %150 = arith.mulf %1, %149 : vector<8x128xf32>
    %c7_25 = arith.constant 7 : index
    %151 = memref.load %arg3[%c7_25] : memref<8xf32, #tpu.memory_space<smem>>
    %152 = vector.broadcast %151 : f32 to vector<8x128xf32>
    %153 = arith.addf %150, %152 : vector<8x128xf32>
    %c29 = arith.constant 29 : index
    %154 = memref.load %arg2[%c29] : memref<32xf32, #tpu.memory_space<smem>>
    %155 = vector.broadcast %154 : f32 to vector<8x128xf32>
    %156 = arith.mulf %3, %155 : vector<8x128xf32>
    %157 = arith.addf %153, %156 : vector<8x128xf32>
    %c30 = arith.constant 30 : index
    %158 = memref.load %arg2[%c30] : memref<32xf32, #tpu.memory_space<smem>>
    %159 = vector.broadcast %158 : f32 to vector<8x128xf32>
    %160 = arith.mulf %5, %159 : vector<8x128xf32>
    %161 = arith.addf %157, %160 : vector<8x128xf32>
    %c31 = arith.constant 31 : index
    %162 = memref.load %arg2[%c31] : memref<32xf32, #tpu.memory_space<smem>>
    %163 = vector.broadcast %162 : f32 to vector<8x128xf32>
    %164 = arith.mulf %7, %163 : vector<8x128xf32>
    %165 = arith.addf %161, %164 : vector<8x128xf32>
    %cst_26 = arith.constant 0.000000e+00 : f32
    %166 = vector.broadcast %cst_26 : f32 to vector<8x128xf32>
    %167 = arith.maximumf %165, %166 : vector<8x128xf32>
    %c0_27 = arith.constant 0 : index
    %168 = memref.load %arg4[%c0_27] : memref<24xf32, #tpu.memory_space<smem>>
    %169 = vector.broadcast %168 : f32 to vector<8x128xf32>
    %170 = arith.mulf %27, %169 : vector<8x128xf32>
    %c0_28 = arith.constant 0 : index
    %171 = memref.load %arg5[%c0_28] : memref<3xf32, #tpu.memory_space<smem>>
    %172 = vector.broadcast %171 : f32 to vector<8x128xf32>
    %173 = arith.addf %170, %172 : vector<8x128xf32>
    %c1_29 = arith.constant 1 : index
    %174 = memref.load %arg4[%c1_29] : memref<24xf32, #tpu.memory_space<smem>>
    %175 = vector.broadcast %174 : f32 to vector<8x128xf32>
    %176 = arith.mulf %47, %175 : vector<8x128xf32>
    %177 = arith.addf %173, %176 : vector<8x128xf32>
    %c2_30 = arith.constant 2 : index
    %178 = memref.load %arg4[%c2_30] : memref<24xf32, #tpu.memory_space<smem>>
    %179 = vector.broadcast %178 : f32 to vector<8x128xf32>
    %180 = arith.mulf %67, %179 : vector<8x128xf32>
    %181 = arith.addf %177, %180 : vector<8x128xf32>
    %c3_31 = arith.constant 3 : index
    %182 = memref.load %arg4[%c3_31] : memref<24xf32, #tpu.memory_space<smem>>
    %183 = vector.broadcast %182 : f32 to vector<8x128xf32>
    %184 = arith.mulf %87, %183 : vector<8x128xf32>
    %185 = arith.addf %181, %184 : vector<8x128xf32>
    %c4_32 = arith.constant 4 : index
    %186 = memref.load %arg4[%c4_32] : memref<24xf32, #tpu.memory_space<smem>>
    %187 = vector.broadcast %186 : f32 to vector<8x128xf32>
    %188 = arith.mulf %107, %187 : vector<8x128xf32>
    %189 = arith.addf %185, %188 : vector<8x128xf32>
    %c5_33 = arith.constant 5 : index
    %190 = memref.load %arg4[%c5_33] : memref<24xf32, #tpu.memory_space<smem>>
    %191 = vector.broadcast %190 : f32 to vector<8x128xf32>
    %192 = arith.mulf %127, %191 : vector<8x128xf32>
    %193 = arith.addf %189, %192 : vector<8x128xf32>
    %c6_34 = arith.constant 6 : index
    %194 = memref.load %arg4[%c6_34] : memref<24xf32, #tpu.memory_space<smem>>
    %195 = vector.broadcast %194 : f32 to vector<8x128xf32>
    %196 = arith.mulf %147, %195 : vector<8x128xf32>
    %197 = arith.addf %193, %196 : vector<8x128xf32>
    %c7_35 = arith.constant 7 : index
    %198 = memref.load %arg4[%c7_35] : memref<24xf32, #tpu.memory_space<smem>>
    %199 = vector.broadcast %198 : f32 to vector<8x128xf32>
    %200 = arith.mulf %167, %199 : vector<8x128xf32>
    %201 = arith.addf %197, %200 : vector<8x128xf32>
    %c8_36 = arith.constant 8 : index
    %202 = memref.load %arg4[%c8_36] : memref<24xf32, #tpu.memory_space<smem>>
    %203 = vector.broadcast %202 : f32 to vector<8x128xf32>
    %204 = arith.mulf %27, %203 : vector<8x128xf32>
    %c1_37 = arith.constant 1 : index
    %205 = memref.load %arg5[%c1_37] : memref<3xf32, #tpu.memory_space<smem>>
    %206 = vector.broadcast %205 : f32 to vector<8x128xf32>
    %207 = arith.addf %204, %206 : vector<8x128xf32>
    %c9_38 = arith.constant 9 : index
    %208 = memref.load %arg4[%c9_38] : memref<24xf32, #tpu.memory_space<smem>>
    %209 = vector.broadcast %208 : f32 to vector<8x128xf32>
    %210 = arith.mulf %47, %209 : vector<8x128xf32>
    %211 = arith.addf %207, %210 : vector<8x128xf32>
    %c10_39 = arith.constant 10 : index
    %212 = memref.load %arg4[%c10_39] : memref<24xf32, #tpu.memory_space<smem>>
    %213 = vector.broadcast %212 : f32 to vector<8x128xf32>
    %214 = arith.mulf %67, %213 : vector<8x128xf32>
    %215 = arith.addf %211, %214 : vector<8x128xf32>
    %c11_40 = arith.constant 11 : index
    %216 = memref.load %arg4[%c11_40] : memref<24xf32, #tpu.memory_space<smem>>
    %217 = vector.broadcast %216 : f32 to vector<8x128xf32>
    %218 = arith.mulf %87, %217 : vector<8x128xf32>
    %219 = arith.addf %215, %218 : vector<8x128xf32>
    %c12_41 = arith.constant 12 : index
    %220 = memref.load %arg4[%c12_41] : memref<24xf32, #tpu.memory_space<smem>>
    %221 = vector.broadcast %220 : f32 to vector<8x128xf32>
    %222 = arith.mulf %107, %221 : vector<8x128xf32>
    %223 = arith.addf %219, %222 : vector<8x128xf32>
    %c13_42 = arith.constant 13 : index
    %224 = memref.load %arg4[%c13_42] : memref<24xf32, #tpu.memory_space<smem>>
    %225 = vector.broadcast %224 : f32 to vector<8x128xf32>
    %226 = arith.mulf %127, %225 : vector<8x128xf32>
    %227 = arith.addf %223, %226 : vector<8x128xf32>
    %c14_43 = arith.constant 14 : index
    %228 = memref.load %arg4[%c14_43] : memref<24xf32, #tpu.memory_space<smem>>
    %229 = vector.broadcast %228 : f32 to vector<8x128xf32>
    %230 = arith.mulf %147, %229 : vector<8x128xf32>
    %231 = arith.addf %227, %230 : vector<8x128xf32>
    %c15_44 = arith.constant 15 : index
    %232 = memref.load %arg4[%c15_44] : memref<24xf32, #tpu.memory_space<smem>>
    %233 = vector.broadcast %232 : f32 to vector<8x128xf32>
    %234 = arith.mulf %167, %233 : vector<8x128xf32>
    %235 = arith.addf %231, %234 : vector<8x128xf32>
    %c16_45 = arith.constant 16 : index
    %236 = memref.load %arg4[%c16_45] : memref<24xf32, #tpu.memory_space<smem>>
    %237 = vector.broadcast %236 : f32 to vector<8x128xf32>
    %238 = arith.mulf %27, %237 : vector<8x128xf32>
    %c2_46 = arith.constant 2 : index
    %239 = memref.load %arg5[%c2_46] : memref<3xf32, #tpu.memory_space<smem>>
    %240 = vector.broadcast %239 : f32 to vector<8x128xf32>
    %241 = arith.addf %238, %240 : vector<8x128xf32>
    %c17_47 = arith.constant 17 : index
    %242 = memref.load %arg4[%c17_47] : memref<24xf32, #tpu.memory_space<smem>>
    %243 = vector.broadcast %242 : f32 to vector<8x128xf32>
    %244 = arith.mulf %47, %243 : vector<8x128xf32>
    %245 = arith.addf %241, %244 : vector<8x128xf32>
    %c18_48 = arith.constant 18 : index
    %246 = memref.load %arg4[%c18_48] : memref<24xf32, #tpu.memory_space<smem>>
    %247 = vector.broadcast %246 : f32 to vector<8x128xf32>
    %248 = arith.mulf %67, %247 : vector<8x128xf32>
    %249 = arith.addf %245, %248 : vector<8x128xf32>
    %c19_49 = arith.constant 19 : index
    %250 = memref.load %arg4[%c19_49] : memref<24xf32, #tpu.memory_space<smem>>
    %251 = vector.broadcast %250 : f32 to vector<8x128xf32>
    %252 = arith.mulf %87, %251 : vector<8x128xf32>
    %253 = arith.addf %249, %252 : vector<8x128xf32>
    %c20_50 = arith.constant 20 : index
    %254 = memref.load %arg4[%c20_50] : memref<24xf32, #tpu.memory_space<smem>>
    %255 = vector.broadcast %254 : f32 to vector<8x128xf32>
    %256 = arith.mulf %107, %255 : vector<8x128xf32>
    %257 = arith.addf %253, %256 : vector<8x128xf32>
    %c21_51 = arith.constant 21 : index
    %258 = memref.load %arg4[%c21_51] : memref<24xf32, #tpu.memory_space<smem>>
    %259 = vector.broadcast %258 : f32 to vector<8x128xf32>
    %260 = arith.mulf %127, %259 : vector<8x128xf32>
    %261 = arith.addf %257, %260 : vector<8x128xf32>
    %c22_52 = arith.constant 22 : index
    %262 = memref.load %arg4[%c22_52] : memref<24xf32, #tpu.memory_space<smem>>
    %263 = vector.broadcast %262 : f32 to vector<8x128xf32>
    %264 = arith.mulf %147, %263 : vector<8x128xf32>
    %265 = arith.addf %261, %264 : vector<8x128xf32>
    %c23_53 = arith.constant 23 : index
    %266 = memref.load %arg4[%c23_53] : memref<24xf32, #tpu.memory_space<smem>>
    %267 = vector.broadcast %266 : f32 to vector<8x128xf32>
    %268 = arith.mulf %167, %267 : vector<8x128xf32>
    %269 = arith.addf %265, %268 : vector<8x128xf32>
    %270 = arith.maximumf %201, %235 : vector<8x128xf32>
    %271 = arith.maximumf %270, %269 : vector<8x128xf32>
    %272 = arith.subf %201, %271 : vector<8x128xf32>
    %273 = math.exp %272 : vector<8x128xf32>
    %274 = arith.subf %235, %271 : vector<8x128xf32>
    %275 = math.exp %274 : vector<8x128xf32>
    %276 = arith.subf %269, %271 : vector<8x128xf32>
    %277 = math.exp %276 : vector<8x128xf32>
    %278 = arith.addf %273, %275 : vector<8x128xf32>
    %279 = arith.addf %278, %277 : vector<8x128xf32>
    %cst_54 = arith.constant 1.000000e+00 : f32
    %280 = vector.broadcast %cst_54 : f32 to vector<8x128xf32>
    %281 = arith.divf %280, %279 : vector<8x128xf32>
    %282 = arith.mulf %273, %281 : vector<8x128xf32>
    %c0_55 = arith.constant 0 : index
    %c0_56 = arith.constant 0 : index
    %c0_57 = arith.constant 0 : index
    %283 = vector.load %arg6[%c0_55, %c0_56, %c0_57] : memref<3x8x128xf32, #tpu.memory_space<vmem>>, vector<1x8x128xf32>
    %284 = vector.shape_cast %283 : vector<1x8x128xf32> to vector<8x128xf32>
    %285 = vector.shape_cast %282 : vector<8x128xf32> to vector<1x8x128xf32>
    tpu.vector_store %arg6[%c0_55, %c0_56, %c0_57], %285 {strides = array<i32>} : memref<3x8x128xf32, #tpu.memory_space<vmem>>, vector<1x8x128xf32>,
    %286 = arith.mulf %275, %281 : vector<8x128xf32>
    %c1_58 = arith.constant 1 : index
    %c0_59 = arith.constant 0 : index
    %c0_60 = arith.constant 0 : index
    %287 = vector.load %arg6[%c1_58, %c0_59, %c0_60] : memref<3x8x128xf32, #tpu.memory_space<vmem>>, vector<1x8x128xf32>
    %288 = vector.shape_cast %287 : vector<1x8x128xf32> to vector<8x128xf32>
    %289 = vector.shape_cast %286 : vector<8x128xf32> to vector<1x8x128xf32>
    tpu.vector_store %arg6[%c1_58, %c0_59, %c0_60], %289 {strides = array<i32>} : memref<3x8x128xf32, #tpu.memory_space<vmem>>, vector<1x8x128xf32>,
    %290 = arith.mulf %277, %281 : vector<8x128xf32>
    %c2_61 = arith.constant 2 : index
    %c0_62 = arith.constant 0 : index
    %c0_63 = arith.constant 0 : index
    %291 = vector.load %arg6[%c2_61, %c0_62, %c0_63] : memref<3x8x128xf32, #tpu.memory_space<vmem>>, vector<1x8x128xf32>
    %292 = vector.shape_cast %291 : vector<1x8x128xf32> to vector<8x128xf32>
    %293 = vector.shape_cast %290 : vector<8x128xf32> to vector<1x8x128xf32>
    tpu.vector_store %arg6[%c2_61, %c0_62, %c0_63], %293 {strides = array<i32>} : memref<3x8x128xf32, #tpu.memory_space<vmem>>, vector<1x8x128xf32>,
    return
  }
  func.func @transform_0(%arg0: i32) -> (i32, i32, i32) {
    %c0_i32 = arith.constant 0 : i32
    %c0_i32_0 = arith.constant 0 : i32
    %c0_i32_1 = arith.constant 0 : i32
    return %c0_i32, %arg0, %c0_i32_0 : i32, i32, i32
  }
  func.func @transform_1(%arg0: i32) -> i32 {
    %c0_i32 = arith.constant 0 : i32
    %c0_i32_0 = arith.constant 0 : i32
    return %c0_i32 : i32
  }
  func.func @transform_2(%arg0: i32) -> i32 {
    %c0_i32 = arith.constant 0 : i32
    %c0_i32_0 = arith.constant 0 : i32
    return %c0_i32 : i32
  }
  func.func @transform_3(%arg0: i32) -> i32 {
    %c0_i32 = arith.constant 0 : i32
    %c0_i32_0 = arith.constant 0 : i32
    return %c0_i32 : i32
  }
  func.func @transform_4(%arg0: i32) -> i32 {
    %c0_i32 = arith.constant 0 : i32
    %c0_i32_0 = arith.constant 0 : i32
    return %c0_i32 : i32
  }
  func.func @transform_5(%arg0: i32) -> (i32, i32, i32) {
    %c0_i32 = arith.constant 0 : i32
    %c0_i32_0 = arith.constant 0 : i32
    %c0_i32_1 = arith.constant 0 : i32
    return %c0_i32, %arg0, %c0_i32_0 : i32, i32, i32
  }
}

</mosaic_0001>

<llo_original>
// kernel: tpu_custom_call.1
$region0: #{tpu_custom_call.1}
  #allocation0 [shape = 'u32[]', space=smem, size = 0x4, offset = 0x4, fixed_abs, tag = 'smem constant byte address 0x4 - core index']
  #allocation1 [shape = 'u32[72,128]{1,0:T(1,128)}', space=vmem, size = 0x9000, scoped, tag = 'internal scratch']
  %s0 = inlined_call_operand.hbm [shape: f32[4,16,128], index: 0, kind: input, shape index: {}]
  %s1 = inlined_call_operand.hbm [shape: f32[32], index: 1, kind: input, shape index: {}]
  %s2 = inlined_call_operand.vmem [shape: f32[8], index: 2, kind: input, shape index: {}]
  %s3 = inlined_call_operand.vmem [shape: f32[24], index: 3, kind: input, shape index: {}]
  %s4 = inlined_call_operand.vmem [shape: f32[3], index: 4, kind: input, shape index: {}]
  %s5 = inlined_call_operand.hbm [shape: f32[3,16,128], index: 5, kind: output, shape index: {}]
  %s6 = sld [smem:[#allocation0]]
  $region73: #{tpu_custom_call.1} parent=0
    _
  %s8 = ssub.s32 1, %s6
  %s9 = scalar_select 0, %s8, %s6
  $region1: #{tpu_custom_call.1} parent=0
    #allocation2 [shape = 'u8[32768]{0}', space=vmem, size = 0x8000, scoped, tag = 'input window, operand 0']
    #allocation3 [shape = 's32[2]{0}', space=sflag, size = 0x8, scoped, tag = 'scoped memory for tpu_custom_call.1']
    #allocation4 [shape = 's32[2]{0}', space=sflag, size = 0x8, scoped, tag = 'scoped memory for tpu_custom_call.1']
    #allocation5 [shape = 's32[2]{0}', space=sflag, size = 0x8, scoped, tag = 'scoped memory for tpu_custom_call.1']
    #allocation6 [shape = 's32[2]{0}', space=sflag, size = 0x8, scoped, tag = 'scoped memory for tpu_custom_call.1']
    #allocation7 [shape = 'u8[512]{0}', space=smem, size = 0x200, scoped, tag = 'input window, operand 1, single buffered']
    #allocation8 [shape = 'u8[512]{0}', space=smem, size = 0x200, scoped, tag = 'input window, operand 2, single buffered']
    #allocation9 [shape = 'u8[512]{0}', space=smem, size = 0x200, scoped, tag = 'input window, operand 3, single buffered']
    #allocation10 [shape = 's32[1]{0}', space=sflag, size = 0x4, scoped, tag = 'scoped memory for tpu_custom_call.1']
    #allocation11 [shape = 'u8[512]{0}', space=smem, size = 0x200, scoped, tag = 'input window, operand 4, single buffered']
    #allocation12 [shape = 'u8[24576]{0}', space=vmem, size = 0x6000, scoped, tag = 'output window, operand 0']
    %10 = vsyncpa [#allocation3], 0
    %s11 = scalar_lea.sflag [#allocation3], 1
    %12 = vsyncpa %s11, 0
    %13 = vsyncpa [#allocation5], 0
    %14 = vsyncpa [#allocation6], 0
    %15 = vsyncpa [#allocation10], 0
    %16 = vsyncpa [#allocation4], 0
    %s17 = scalar_lea.sflag [#allocation4], 1
    %18 = vsyncpa %s17, 0
    loop: start=0, step=1, limit=4
    $region2: #{tpu_custom_call.1} parent=1 // loop_pre_header
      _
    $region3: #{tpu_custom_call.1} parent=1 // loop_header
      %s20 = sphi 0, %s24
      %p21 = scmp.ge.s32.totalorder %s20, 4
      %s30 = sphi 0, %s32
      %s33 = sphi 0, %s30
      %s34 = sphi 0, %s33
      %s50 = sphi 0, %s34
      %s54 = sphi 0, %s54
      %s56 = sphi 0, %s54
      %s57 = sphi 0, %s56
      %s71 = sphi 0, %s57
      %s75 = sphi 0, %s75
      %s77 = sphi 0, %s75
      %s78 = sphi 0, %s77
      %s92 = sphi 0, %s78
      %s96 = sphi 0, %s96
      %s98 = sphi 0, %s96
      %s99 = sphi 0, %s98
      %s113 = sphi 0, %s99
      %s117 = sphi 0, %s117
      %s119 = sphi 0, %s117
      %s120 = sphi 0, %s119
      %s134 = sphi 0, %s120
      %s140 = sphi 0, %s142
      %s143 = sphi 0, %s140
      %s144 = sphi 0, %s143
      %s160 = sphi 0, %s144
    $region4: #{tpu_custom_call.1} parent=1 // loop_header_branch
      %23 = sbr.rel (%p21) target = $region8
    $region5: #{tpu_custom_call.1} parent=1 // loop_body
      %s25 = ssub.s32 %s20, 1
      %s26 = ssub.s32 %s20, 2
      %s27 = sadd.s32 %s20, 1
      %s28 = ssub.s32 %s20, %s27
      %p29 = scmp.eq.s32.totalorder %s28, 0
      %s31 = sadd.s32 %s30, 1
      %s32 = scalar_select %p29, %s30, %s31
      %p35 = pneg %p29
      %p36 = scmp.eq.s32.totalorder %s20, 1
      %p37 = por %p35, %p36
      %p38 = scmp.ne.s32.totalorder %s30, %s33
      %p39 = scmp.eq.s32.totalorder %s20, 0
      %p40 = por %p38, %p39
      %p41 = scmp.ne.s32.totalorder %s30, %s33
      %p42 = scmp.eq.s32.totalorder %s25, 1
      %p43 = por %p41, %p42
      %p44 = scmp.ne.s32.totalorder %s33, %s34
      %p45 = scmp.eq.s32.totalorder %s25, 0
      %p46 = por %p44, %p45
      %p47 = scmp.ne.s32.totalorder %s33, %s34
      %p48 = scmp.eq.s32.totalorder %s26, 1
      %p49 = por %p47, %p48
      %p51 = scmp.ne.s32.totalorder %s34, %s50
      %p52 = scmp.eq.s32.totalorder %s26, 0
      %p53 = por %p51, %p52
      %s55 = sadd.s32 %s54, 1
      %p58 = scmp.eq.s32.totalorder %s20, 1
      %p59 = scmp.ne.s32.totalorder %s54, %s56
      %p60 = scmp.eq.s32.totalorder %s20, 0
      %p61 = por %p59, %p60
      %p62 = scmp.ne.s32.totalorder %s54, %s56
      %p63 = scmp.eq.s32.totalorder %s25, 1
      %p64 = por %p62, %p63
      %p65 = scmp.ne.s32.totalorder %s56, %s57
      %p66 = scmp.eq.s32.totalorder %s25, 0
      %p67 = por %p65, %p66
      %p68 = scmp.ne.s32.totalorder %s56, %s57
      %p69 = scmp.eq.s32.totalorder %s26, 1
      %p70 = por %p68, %p69
      %p72 = scmp.ne.s32.totalorder %s57, %s71
      %p73 = scmp.eq.s32.totalorder %s26, 0
      %p74 = por %p72, %p73
      %s76 = sadd.s32 %s75, 1
      %p79 = scmp.eq.s32.totalorder %s20, 1
      %p80 = scmp.ne.s32.totalorder %s75, %s77
      %p81 = scmp.eq.s32.totalorder %s20, 0
      %p82 = por %p80, %p81
      %p83 = scmp.ne.s32.totalorder %s75, %s77
      %p84 = scmp.eq.s32.totalorder %s25, 1
      %p85 = por %p83, %p84
      %p86 = scmp.ne.s32.totalorder %s77, %s78
      %p87 = scmp.eq.s32.totalorder %s25, 0
      %p88 = por %p86, %p87
      %p89 = scmp.ne.s32.totalorder %s77, %s78
      %p90 = scmp.eq.s32.totalorder %s26, 1
      %p91 = por %p89, %p90
      %p93 = scmp.ne.s32.totalorder %s78, %s92
      %p94 = scmp.eq.s32.totalorder %s26, 0
      %p95 = por %p93, %p94
      %s97 = sadd.s32 %s96, 1
      %p100 = scmp.eq.s32.totalorder %s20, 1
      %p101 = scmp.ne.s32.totalorder %s96, %s98
      %p102 = scmp.eq.s32.totalorder %s20, 0
      %p103 = por %p101, %p102
      %p104 = scmp.ne.s32.totalorder %s96, %s98
      %p105 = scmp.eq.s32.totalorder %s25, 1
      %p106 = por %p104, %p105
      %p107 = scmp.ne.s32.totalorder %s98, %s99
      %p108 = scmp.eq.s32.totalorder %s25, 0
      %p109 = por %p107, %p108
      %p110 = scmp.ne.s32.totalorder %s98, %s99
      %p111 = scmp.eq.s32.totalorder %s26, 1
      %p112 = por %p110, %p111
      %p114 = scmp.ne.s32.totalorder %s99, %s113
      %p115 = scmp.eq.s32.totalorder %s26, 0
      %p116 = por %p114, %p115
      %s118 = sadd.s32 %s117, 1
      %p121 = scmp.eq.s32.totalorder %s20, 1
      %p122 = scmp.ne.s32.totalorder %s117, %s119
      %p123 = scmp.eq.s32.totalorder %s20, 0
      %p124 = por %p122, %p123
      %p125 = scmp.ne.s32.totalorder %s117, %s119
      %p126 = scmp.eq.s32.totalorder %s25, 1
      %p127 = por %p125, %p126
      %p128 = scmp.ne.s32.totalorder %s119, %s120
      %p129 = scmp.eq.s32.totalorder %s25, 0
      %p130 = por %p128, %p129
      %p131 = scmp.ne.s32.totalorder %s119, %s120
      %p132 = scmp.eq.s32.totalorder %s26, 1
      %p133 = por %p131, %p132
      %p135 = scmp.ne.s32.totalorder %s120, %s134
      %p136 = scmp.eq.s32.totalorder %s26, 0
      %p137 = por %p135, %p136
      %s138 = ssub.s32 %s20, %s27
      %p139 = scmp.eq.s32.totalorder %s138, 0
      %s141 = sadd.s32 %s140, 1
      %s142 = scalar_select %p139, %s140, %s141
      %p145 = pneg %p139
      %p146 = scmp.eq.s32.totalorder %s20, 1
      %p147 = por %p145, %p146
      %p148 = scmp.ne.s32.totalorder %s140, %s143
      %p149 = scmp.eq.s32.totalorder %s20, 0
      %p150 = por %p148, %p149
      %p151 = scmp.ne.s32.totalorder %s140, %s143
      %p152 = scmp.eq.s32.totalorder %s25, 1
      %p153 = por %p151, %p152
      %p154 = scmp.ne.s32.totalorder %s143, %s144
      %p155 = scmp.eq.s32.totalorder %s25, 0
      %p156 = por %p154, %p155
      %p157 = scmp.ne.s32.totalorder %s143, %s144
      %p158 = scmp.eq.s32.totalorder %s26, 1
      %p159 = por %p157, %p158
      %p161 = scmp.ne.s32.totalorder %s144, %s160
      %p162 = scmp.eq.s32.totalorder %s26, 0
      %p163 = por %p161, %p162
      %p164 = scmp.le.s32.totalorder 1, %s20
      %p165 = scmp.lt.s32.totalorder %s20, 3
      %p166 = pnand %p164, %p165
      %p167 = pneg %p166
      // Predicated region
      $region9: #{tpu_custom_call.1} parent=5 // pred_check
        _
      $region10: #{tpu_custom_call.1} parent=5 // pred_check_branch
        %169 = sbr.rel (%p166) target = $region12
      $region11: #{tpu_custom_call.1} parent=5 // pred_region
        %s170 = ssub.s32 %s20, 1
        // Predicated region
        $region13: #{tpu_custom_call.1} parent=11 // pred_check
          %p171 = pneg %p67
        $region14: #{tpu_custom_call.1} parent=11 // pred_check_branch
          %173 = sbr.rel (%p171) target = $region16
        $region15: #{tpu_custom_call.1} parent=11 // pred_region
          %175 = vsyncadd [#allocation5], 0
          %s177 = sshll.u32 %s1, 4
          %s178 = int_to_ptr.hbm [resolvable:$true] %s177
          %180 = dma.hbm_to_smem %s178, 16, [#allocation7], [#allocation5]
        $region16: #{tpu_custom_call.1} parent=11 // pred_fallthru
          _
        // Predicated region
        $region17: #{tpu_custom_call.1} parent=11 // pred_check
          %p181 = pneg %p88
        $region18: #{tpu_custom_call.1} parent=11 // pred_check_branch
          %183 = sbr.rel (%p181) target = $region20
        $region19: #{tpu_custom_call.1} parent=11 // pred_region
          %185 = vsyncadd [#allocation6], 0
          %s187 = sshll.u32 %s2, 4
          %s188 = int_to_ptr.vmem [resolvable:$true] %s187
          %190 = dma.vmem_to_smem %s188, 16, [#allocation8], [#allocation6]
        $region20: #{tpu_custom_call.1} parent=11 // pred_fallthru
          _
        // Predicated region
        $region21: #{tpu_custom_call.1} parent=11 // pred_check
          %p191 = pneg %p109
        $region22: #{tpu_custom_call.1} parent=11 // pred_check_branch
          %193 = sbr.rel (%p191) target = $region24
        $region23: #{tpu_custom_call.1} parent=11 // pred_region
          %195 = vsyncadd [#allocation10], 0
          %s197 = sshll.u32 %s3, 4
          %s198 = int_to_ptr.vmem [resolvable:$true] %s197
          %200 = dma.vmem_to_smem %s198, 16, [#allocation9], [#allocation10]
        $region24: #{tpu_custom_call.1} parent=11 // pred_fallthru
          _
        // Predicated region
        $region25: #{tpu_custom_call.1} parent=11 // pred_check
          %p201 = pneg %p130
        $region26: #{tpu_custom_call.1} parent=11 // pred_check_branch
          %203 = sbr.rel (%p201) target = $region28
        $region27: #{tpu_custom_call.1} parent=11 // pred_region
          %205 = vsyncadd [#allocation10], 0
          %s207 = sshll.u32 %s4, 4
          %s208 = int_to_ptr.vmem [resolvable:$true] %s207
          %210 = dma.vmem_to_smem %s208, 16, [#allocation11], [#allocation10]
        $region28: #{tpu_custom_call.1} parent=11 // pred_fallthru
          _
      $region12: #{tpu_custom_call.1} parent=5 // pred_fallthru
        _
      %p211 = scmp.lt.s32.totalorder %s20, 2
      // Predicated region
      $region29: #{tpu_custom_call.1} parent=5 // pred_check
        %p212 = pneg %p211
      $region30: #{tpu_custom_call.1} parent=5 // pred_check_branch
        %214 = sbr.rel (%p212) target = $region32
      $region31: #{tpu_custom_call.1} parent=5 // pred_region
        // Predicated region
        $region33: #{tpu_custom_call.1} parent=31 // pred_check
          %p215 = pneg %p40
        $region34: #{tpu_custom_call.1} parent=31 // pred_check_branch
          %217 = sbr.rel (%p215) target = $region36
        $region35: #{tpu_custom_call.1} parent=31 // pred_region
          %s218 = sand.u32 %s30, 1
          %s219 = scalar_lea.sflag [#allocation3], %s218
          %s220 = sand.u32 %s30, 1
          %s221 = smul.addr %s220, 32
          %s222 = scalar_lea.vmem [#allocation2], %s221
          %224 = vsyncadd %s219, 0
          %s225 = smul.addr %s20, 8
          %s226 = scalar_lea.hbm %s0, %s225
          %s227 = sshll.u32 %s226, 4
          %s228 = int_to_ptr.hbm [resolvable:$true] %s227
          %s229 = sshll.u32 %s222, 4
          %s230 = int_to_ptr.vmem [resolvable:$true] %s229
          %235 = dma.hbm_to_vmem [thread:$0]  %s228, 512, %s230, %s219, 256, 128, 8
        $region36: #{tpu_custom_call.1} parent=31 // pred_fallthru
          _
      $region32: #{tpu_custom_call.1} parent=5 // pred_fallthru
        _
      %p236 = scmp.le.s32.totalorder 1, %s20
      %p237 = scmp.lt.s32.totalorder %s20, 3
      %p238 = pnand %p236, %p237
      %p239 = pneg %p238
      // Predicated region
      $region37: #{tpu_custom_call.1} parent=5 // pred_check
        _
      $region38: #{tpu_custom_call.1} parent=5 // pred_check_branch
        %241 = sbr.rel (%p238) target = $region40
      $region39: #{tpu_custom_call.1} parent=5 // pred_region
        %s242 = ssub.s32 %s20, 1
        %s243 = sand.u32 %s33, 1
        %s244 = scalar_lea.sflag [#allocation3], %s243
        %s245 = sand.u32 %s33, 1
        %s246 = smul.addr %s245, 32
        %s247 = scalar_lea.vmem [#allocation2], %s246
        // Predicated region
        $region41: #{tpu_custom_call.1} parent=39 // pred_check
          %p248 = pneg %p46
        $region42: #{tpu_custom_call.1} parent=39 // pred_check_branch
          %250 = sbr.rel (%p248) target = $region44
        $region43: #{tpu_custom_call.1} parent=39 // pred_region
          %252 = dma.done %s244, 512
        $region44: #{tpu_custom_call.1} parent=39 // pred_fallthru
          _
        // Predicated region
        $region45: #{tpu_custom_call.1} parent=39 // pred_check
          %p253 = pneg %p67
        $region46: #{tpu_custom_call.1} parent=39 // pred_check_branch
          %255 = sbr.rel (%p253) target = $region48
        $region47: #{tpu_custom_call.1} parent=39 // pred_region
          %257 = dma.done [#allocation5], 16
        $region48: #{tpu_custom_call.1} parent=39 // pred_fallthru
          _
        // Predicated region
        $region49: #{tpu_custom_call.1} parent=39 // pred_check
          %p258 = pneg %p88
        $region50: #{tpu_custom_call.1} parent=39 // pred_check_branch
          %260 = sbr.rel (%p258) target = $region52
        $region51: #{tpu_custom_call.1} parent=39 // pred_region
          %262 = dma.done [#allocation6], 16
        $region52: #{tpu_custom_call.1} parent=39 // pred_fallthru
          _
        // Predicated region
        $region53: #{tpu_custom_call.1} parent=39 // pred_check
          %p263 = pneg %p109
        $region54: #{tpu_custom_call.1} parent=39 // pred_check_branch
          %265 = sbr.rel (%p263) target = $region56
        $region55: #{tpu_custom_call.1} parent=39 // pred_region
          %267 = dma.done [#allocation10], 16
        $region56: #{tpu_custom_call.1} parent=39 // pred_fallthru
          _
        // Predicated region
        $region57: #{tpu_custom_call.1} parent=39 // pred_check
          %p268 = pneg %p130
        $region58: #{tpu_custom_call.1} parent=39 // pred_check_branch
          %270 = sbr.rel (%p268) target = $region60
        $region59: #{tpu_custom_call.1} parent=39 // pred_region
          %272 = dma.done [#allocation10], 16
        $region60: #{tpu_custom_call.1} parent=39 // pred_fallthru
          _
        %273 = sfence
        %s274 = sand.u32 %s33, 1
        %s275 = scalar_lea.sflag [#allocation3], %s274
        %s276 = sand.u32 %s33, 1
        %s277 = smul.addr %s276, 32
        %s278 = scalar_lea.vmem [#allocation2], %s277
        %p279 = pneg %p46
        %p280 = pneg %p43
        %p281 = pneg %p67
        %p282 = pneg %p64
        %p283 = pneg %p88
        %p284 = pneg %p85
        %p285 = pneg %p109
        %p286 = pneg %p106
        %p287 = pneg %p130
        %p288 = pneg %p127
        %p289 = pneg %p156
        %p290 = pneg %p153
        %s291 = sand.u32 %s143, 1
        %s292 = scalar_lea.sflag [#allocation4], %s291
        %s293 = sand.u32 %s143, 1
        %s294 = smul.addr %s293, 24
        %s295 = scalar_lea.vmem [#allocation12], %s294
        %v296 = vld [vmem:[%s247] sm:$0xff]
        %s297 = scalar_lea.vmem %s247, 8 [#allocation2]
        %v298 = vld [vmem:[%s297] sm:$0xff]
        %s299 = scalar_lea.vmem %s247, 16 [#allocation2]
        %v300 = vld [vmem:[%s299] sm:$0xff]
        %s301 = scalar_lea.vmem %s247, 24 [#allocation2]
        %v302 = vld [vmem:[%s301] sm:$0xff]
        %s303 = sld [smem:[#allocation7]]
        %v304 = vstv %s303
        %v305 = vmul.f32 %v296, %v304
        %s306 = sld [smem:[#allocation8]]
        %v307 = vstv %s306
        %v308 = vadd.f32 %v305, %v307
        %s309 = sld [smem:[#allocation7 + $0x1]]
        %v310 = vstv %s309
        %v311 = vmul.f32 %v298, %v310
        %v312 = vadd.f32 %v308, %v311
        %s313 = sld [smem:[#allocation7 + $0x2]]
        %v314 = vstv %s313
        %v315 = vmul.f32 %v300, %v314
        %v316 = vadd.f32 %v312, %v315
        %s317 = sld [smem:[#allocation7 + $0x3]]
        %v318 = vstv %s317
        %v319 = vmul.f32 %v302, %v318
        %v320 = vadd.f32 %v316, %v319
        %v321 = vmax.f32 %v320, 0.0
        %s322 = sld [smem:[#allocation7 + $0x4]]
        %v323 = vstv %s322
        %v324 = vmul.f32 %v296, %v323
        %s325 = sld [smem:[#allocation8 + $0x1]]
        %v326 = vstv %s325
        %v327 = vadd.f32 %v324, %v326
        %s328 = sld [smem:[#allocation7 + $0x5]]
        %v329 = vstv %s328
        %v330 = vmul.f32 %v298, %v329
        %v331 = vadd.f32 %v327, %v330
        %s332 = sld [smem:[#allocation7 + $0x6]]
        %v333 = vstv %s332
        %v334 = vmul.f32 %v300, %v333
        %v335 = vadd.f32 %v331, %v334
        %s336 = sld [smem:[#allocation7 + $0x7]]
        %v337 = vstv %s336
        %v338 = vmul.f32 %v302, %v337
        %v339 = vadd.f32 %v335, %v338
        %v340 = vmax.f32 %v339, 0.0
        %s341 = sld [smem:[#allocation7 + $0x8]]
        %v342 = vstv %s341
        %v343 = vmul.f32 %v296, %v342
        %s344 = sld [smem:[#allocation8 + $0x2]]
        %v345 = vstv %s344
        %v346 = vadd.f32 %v343, %v345
        %s347 = sld [smem:[#allocation7 + $0x9]]
        %v348 = vstv %s347
        %v349 = vmul.f32 %v298, %v348
        %v350 = vadd.f32 %v346, %v349
        %s351 = sld [smem:[#allocation7 + $0xa]]
        %v352 = vstv %s351
        %v353 = vmul.f32 %v300, %v352
        %v354 = vadd.f32 %v350, %v353
        %s355 = sld [smem:[#allocation7 + $0xb]]
        %v356 = vstv %s355
        %v357 = vmul.f32 %v302, %v356
        %v358 = vadd.f32 %v354, %v357
        %v359 = vmax.f32 %v358, 0.0
        %s360 = sld [smem:[#allocation7 + $0xc]]
        %v361 = vstv %s360
        %v362 = vmul.f32 %v296, %v361
        %s363 = sld [smem:[#allocation8 + $0x3]]
        %v364 = vstv %s363
        %v365 = vadd.f32 %v362, %v364
        %s366 = sld [smem:[#allocation7 + $0xd]]
        %v367 = vstv %s366
        %v368 = vmul.f32 %v298, %v367
        %v369 = vadd.f32 %v365, %v368
        %s370 = sld [smem:[#allocation7 + $0xe]]
        %v371 = vstv %s370
        %v372 = vmul.f32 %v300, %v371
        %v373 = vadd.f32 %v369, %v372
        %s374 = sld [smem:[#allocation7 + $0xf]]
        %v375 = vstv %s374
        %v376 = vmul.f32 %v302, %v375
        %v377 = vadd.f32 %v373, %v376
        %v378 = vmax.f32 %v377, 0.0
        %s379 = sld [smem:[#allocation7 + $0x10]]
        %v380 = vstv %s379
        %v381 = vmul.f32 %v296, %v380
        %s382 = sld [smem:[#allocation8 + $0x4]]
        %v383 = vstv %s382
        %v384 = vadd.f32 %v381, %v383
        %s385 = sld [smem:[#allocation7 + $0x11]]
        %v386 = vstv %s385
        %v387 = vmul.f32 %v298, %v386
        %v388 = vadd.f32 %v384, %v387
        %s389 = sld [smem:[#allocation7 + $0x12]]
        %v390 = vstv %s389
        %v391 = vmul.f32 %v300, %v390
        %v392 = vadd.f32 %v388, %v391
        %s393 = sld [smem:[#allocation7 + $0x13]]
        %v394 = vstv %s393
        %v395 = vmul.f32 %v302, %v394
        %v396 = vadd.f32 %v392, %v395
        %v397 = vmax.f32 %v396, 0.0
        %s398 = sld [smem:[#allocation7 + $0x14]]
        %v399 = vstv %s398
        %v400 = vmul.f32 %v296, %v399
        %s401 = sld [smem:[#allocation8 + $0x5]]
        %v402 = vstv %s401
        %v403 = vadd.f32 %v400, %v402
        %s404 = sld [smem:[#allocation7 + $0x15]]
        %v405 = vstv %s404
        %v406 = vmul.f32 %v298, %v405
        %v407 = vadd.f32 %v403, %v406
        %s408 = sld [smem:[#allocation7 + $0x16]]
        %v409 = vstv %s408
        %v410 = vmul.f32 %v300, %v409
        %v411 = vadd.f32 %v407, %v410
        %s412 = sld [smem:[#allocation7 + $0x17]]
        %v413 = vstv %s412
        %v414 = vmul.f32 %v302, %v413
        %v415 = vadd.f32 %v411, %v414
        %v416 = vmax.f32 %v415, 0.0
        %s417 = sld [smem:[#allocation7 + $0x18]]
        %v418 = vstv %s417
        %v419 = vmul.f32 %v296, %v418
        %s420 = sld [smem:[#allocation8 + $0x6]]
        %v421 = vstv %s420
        %v422 = vadd.f32 %v419, %v421
        %s423 = sld [smem:[#allocation7 + $0x19]]
        %v424 = vstv %s423
        %v425 = vmul.f32 %v298, %v424
        %v426 = vadd.f32 %v422, %v425
        %s427 = sld [smem:[#allocation7 + $0x1a]]
        %v428 = vstv %s427
        %v429 = vmul.f32 %v300, %v428
        %v430 = vadd.f32 %v426, %v429
        %s431 = sld [smem:[#allocation7 + $0x1b]]
        %v432 = vstv %s431
        %v433 = vmul.f32 %v302, %v432
        %v434 = vadd.f32 %v430, %v433
        %v435 = vmax.f32 %v434, 0.0
        %s436 = sld [smem:[#allocation7 + $0x1c]]
        %v437 = vstv %s436
        %v438 = vmul.f32 %v296, %v437
        %s439 = sld [smem:[#allocation8 + $0x7]]
        %v440 = vstv %s439
        %v441 = vadd.f32 %v438, %v440
        %s442 = sld [smem:[#allocation7 + $0x1d]]
        %v443 = vstv %s442
        %v444 = vmul.f32 %v298, %v443
        %v445 = vadd.f32 %v441, %v444
        %s446 = sld [smem:[#allocation7 + $0x1e]]
        %v447 = vstv %s446
        %v448 = vmul.f32 %v300, %v447
        %v449 = vadd.f32 %v445, %v448
        %s450 = sld [smem:[#allocation7 + $0x1f]]
        %v451 = vstv %s450
        %v452 = vmul.f32 %v302, %v451
        %v453 = vadd.f32 %v449, %v452
        %v454 = vmax.f32 %v453, 0.0
        %s455 = sld [smem:[#allocation9]]
        %v456 = vstv %s455
        %v457 = vmul.f32 %v321, %v456
        %s458 = sld [smem:[#allocation11]]
        %v459 = vstv %s458
        %v460 = vadd.f32 %v457, %v459
        %s461 = sld [smem:[#allocation9 + $0x1]]
        %v462 = vstv %s461
        %v463 = vmul.f32 %v340, %v462
        %v464 = vadd.f32 %v460, %v463
        %s465 = sld [smem:[#allocation9 + $0x2]]
        %v466 = vstv %s465
        %v467 = vmul.f32 %v359, %v466
        %v468 = vadd.f32 %v464, %v467
        %s469 = sld [smem:[#allocation9 + $0x3]]
        %v470 = vstv %s469
        %v471 = vmul.f32 %v378, %v470
        %v472 = vadd.f32 %v468, %v471
        %s473 = sld [smem:[#allocation9 + $0x4]]
        %v474 = vstv %s473
        %v475 = vmul.f32 %v397, %v474
        %v476 = vadd.f32 %v472, %v475
        %s477 = sld [smem:[#allocation9 + $0x5]]
        %v478 = vstv %s477
        %v479 = vmul.f32 %v416, %v478
        %v480 = vadd.f32 %v476, %v479
        %s481 = sld [smem:[#allocation9 + $0x6]]
        %v482 = vstv %s481
        %v483 = vmul.f32 %v435, %v482
        %v484 = vadd.f32 %v480, %v483
        %s485 = sld [smem:[#allocation9 + $0x7]]
        %v486 = vstv %s485
        %v487 = vmul.f32 %v454, %v486
        %v488 = vadd.f32 %v484, %v487
        %s489 = sld [smem:[#allocation9 + $0x8]]
        %v490 = vstv %s489
        %v491 = vmul.f32 %v321, %v490
        %s492 = sld [smem:[#allocation11 + $0x1]]
        %v493 = vstv %s492
        %v494 = vadd.f32 %v491, %v493
        %s495 = sld [smem:[#allocation9 + $0x9]]
        %v496 = vstv %s495
        %v497 = vmul.f32 %v340, %v496
        %v498 = vadd.f32 %v494, %v497
        %s499 = sld [smem:[#allocation9 + $0xa]]
        %v500 = vstv %s499
        %v501 = vmul.f32 %v359, %v500
        %v502 = vadd.f32 %v498, %v501
        %s503 = sld [smem:[#allocation9 + $0xb]]
        %v504 = vstv %s503
        %v505 = vmul.f32 %v378, %v504
        %v506 = vadd.f32 %v502, %v505
        %s507 = sld [smem:[#allocation9 + $0xc]]
        %v508 = vstv %s507
        %v509 = vmul.f32 %v397, %v508
        %v510 = vadd.f32 %v506, %v509
        %s511 = sld [smem:[#allocation9 + $0xd]]
        %v512 = vstv %s511
        %v513 = vmul.f32 %v416, %v512
        %v514 = vadd.f32 %v510, %v513
        %s515 = sld [smem:[#allocation9 + $0xe]]
        %v516 = vstv %s515
        %v517 = vmul.f32 %v435, %v516
        %v518 = vadd.f32 %v514, %v517
        %s519 = sld [smem:[#allocation9 + $0xf]]
        %v520 = vstv %s519
        %v521 = vmul.f32 %v454, %v520
        %v522 = vadd.f32 %v518, %v521
        %s523 = sld [smem:[#allocation9 + $0x10]]
        %v524 = vstv %s523
        %v525 = vmul.f32 %v321, %v524
        %s526 = sld [smem:[#allocation11 + $0x2]]
        %v527 = vstv %s526
        %v528 = vadd.f32 %v525, %v527
        %s529 = sld [smem:[#allocation9 + $0x11]]
        %v530 = vstv %s529
        %v531 = vmul.f32 %v340, %v530
        %v532 = vadd.f32 %v528, %v531
        %s533 = sld [smem:[#allocation9 + $0x12]]
        %v534 = vstv %s533
        %v535 = vmul.f32 %v359, %v534
        %v536 = vadd.f32 %v532, %v535
        %s537 = sld [smem:[#allocation9 + $0x13]]
        %v538 = vstv %s537
        %v539 = vmul.f32 %v378, %v538
        %v540 = vadd.f32 %v536, %v539
        %s541 = sld [smem:[#allocation9 + $0x14]]
        %v542 = vstv %s541
        %v543 = vmul.f32 %v397, %v542
        %v544 = vadd.f32 %v540, %v543
        %s545 = sld [smem:[#allocation9 + $0x15]]
        %v546 = vstv %s545
        %v547 = vmul.f32 %v416, %v546
        %v548 = vadd.f32 %v544, %v547
        %s549 = sld [smem:[#allocation9 + $0x16]]
        %v550 = vstv %s549
        %v551 = vmul.f32 %v435, %v550
        %v552 = vadd.f32 %v548, %v551
        %s553 = sld [smem:[#allocation9 + $0x17]]
        %v554 = vstv %s553
        %v555 = vmul.f32 %v454, %v554
        %v556 = vadd.f32 %v552, %v555
        %v557 = vmax.f32 %v488, %v522
        %v558 = vmax.f32 %v557, %v556
        %v559 = vsub.f32 %v488, %v558
        %v560 = vmul.f32 %v559, 1.442695
        %v561 = vpow.pop %v560
        %v562 = vsub.f32 %v522, %v558
        %v563 = vmul.f32 %v562, 1.442695
        %v564 = vpow.pop %v563
        %v565 = vsub.f32 %v556, %v558
        %v566 = vmul.f32 %v565, 1.442695
        %v567 = vpow.pop %v566
        %v568 = vadd.f32 %v561, %v564
        %v569 = vadd.f32 %v568, %v567
        %v570 = vrcp.pop %v569
        %v571 = vmul.f32 %v569, %v570
        %v572 = vsub.f32 1.0, %v571
        %v573 = vmul.f32 %v570, %v572
        %v574 = vadd.f32 %v570, %v573
        %vm575 = vweird.f32 %v569
        %vm576 = vweird.f32 %v570
        %vm577 = vmor %vm575, %vm576
        %v578 = vsel %vm577, %v570, %v574
        %v579 = vand.u32 2147483647, %v569
        %vm580 = vcmp.eq.f32.partialorder %v579, 8.507059e+37
        %v581 = vand.u32 %v569, 2147483648
        %v582 = vor.u32 1.1754944e-38, %v581
        %v583 = vsel %vm580, %v582, %v578
        %v584 = vmul.f32 1.0, %v583
        %v585 = vmul.f32 %v561, %v584
        %586 = vst [vmem:[%s295] sm:$0xff] %v585
        %v587 = vmul.f32 %v564, %v584
        %s588 = scalar_lea.vmem %s295, 8 [#allocation12]
        %589 = vst [vmem:[%s588] sm:$0xff] %v587
        %v590 = vmul.f32 %v567, %v584
        %s591 = scalar_lea.vmem %s295, 16 [#allocation12]
        %592 = vst [vmem:[%s591] sm:$0xff] %v590
        %s593 = sand.u32 %s143, 1
        %s594 = scalar_lea.sflag [#allocation4], %s593
        %s595 = sand.u32 %s143, 1
        %s596 = smul.addr %s595, 24
        %s597 = scalar_lea.vmem [#allocation12], %s596
        // Predicated region
        $region61: #{tpu_custom_call.1} parent=39 // pred_check
          %p598 = pneg %p153
        $region62: #{tpu_custom_call.1} parent=39 // pred_check_branch
          %600 = sbr.rel (%p598) target = $region64
        $region63: #{tpu_custom_call.1} parent=39 // pred_region
          %602 = vsyncadd %s594, 0
          %s603 = smul.addr %s25, 8
          %s604 = scalar_lea.hbm %s5, %s603
          %s605 = sshll.u32 %s597, 4
          %s606 = int_to_ptr.vmem [resolvable:$true] %s605
          %s607 = sshll.u32 %s604, 4
          %s608 = int_to_ptr.hbm [resolvable:$true] %s607
          %613 = dma.vmem_to_hbm [thread:$0]  %s606, 384, %s608, %s594, 128, 256, 8
        $region64: #{tpu_custom_call.1} parent=39 // pred_fallthru
          _
      $region40: #{tpu_custom_call.1} parent=5 // pred_fallthru
        _
      %p614 = scmp.le.s32.totalorder 2, %s20
      // Predicated region
      $region65: #{tpu_custom_call.1} parent=5 // pred_check
        %p615 = pneg %p614
      $region66: #{tpu_custom_call.1} parent=5 // pred_check_branch
        %617 = sbr.rel (%p615) target = $region68
      $region67: #{tpu_custom_call.1} parent=5 // pred_region
        %s618 = ssub.s32 %s20, 2
        // Predicated region
        $region69: #{tpu_custom_call.1} parent=67 // pred_check
          %p619 = pneg %p159
        $region70: #{tpu_custom_call.1} parent=67 // pred_check_branch
          %621 = sbr.rel (%p619) target = $region72
        $region71: #{tpu_custom_call.1} parent=67 // pred_region
          %s622 = sand.u32 %s144, 1
          %s623 = scalar_lea.sflag [#allocation4], %s622
          %s624 = sand.u32 %s144, 1
          %s625 = smul.addr %s624, 24
          %s626 = scalar_lea.vmem [#allocation12], %s625
          %628 = dma.done %s623, 384
        $region72: #{tpu_custom_call.1} parent=67 // pred_fallthru
          _
      $region68: #{tpu_custom_call.1} parent=5 // pred_fallthru
        _
    $region6: #{tpu_custom_call.1} parent=1 // loop_footer
      %s24 = sadd.s32 1, %s20
    $region7: #{tpu_custom_call.1} parent=1 // loop_footer_branch
      %19 = sbr.rel target = $region3
    $region8: #{tpu_custom_call.1} parent=1 // loop_exit
      _
    %629 = vsyncpa [#allocation3], 1
    %s630 = scalar_lea.sflag [#allocation3], 1
    %631 = vsyncpa %s630, 1
    %632 = vsyncpa [#allocation4], 1
    %s633 = scalar_lea.sflag [#allocation4], 1
    %634 = vsyncpa %s633, 1
    %635 = vsyncpa [#allocation5], 1
    %s636 = scalar_lea.sflag [#allocation5], 1
    %637 = vsyncpa %s636, 1
    %638 = vsyncpa [#allocation6], 1
    %s639 = scalar_lea.sflag [#allocation6], 1
    %640 = vsyncpa %s639, 1
    %641 = vsyncpa [#allocation10], 1

</llo_original>
